<compile_context>
chip_gen: v5e
topology: v5e:2x2
jax: 0.10.0
libtpu: 0.0.40
codegen_flags: <defaults>
</compile_context>

<pallas_src>
import functools
import math

import jax
import jax.numpy as jnp
from jax import lax
from jax.experimental import pallas as pl
from jax.experimental.pallas import tpu as pltpu


# --------------------------------------------------------------------------------------
# Helpers
# --------------------------------------------------------------------------------------

def _vmem_limit_bytes():
    # v5e/v6e have 128 MiB physical VMEM, v7x has 64 MiB; size the scoped limit per chip.
    try:
        cap = pltpu.get_tpu_info().vmem_capacity_bytes
    except Exception:  # older jax / attribute mismatch -> conservative default
        cap = 64 * 1024 * 1024
    return int(min(cap, 128 * 1024 * 1024) * 0.8)


def _round_up(x, m):
    return (x + m - 1) // m * m


# --------------------------------------------------------------------------------------
# Tiled matmul kernel (projections)
# --------------------------------------------------------------------------------------

def _matmul_kernel(x_ref, w_ref, o_ref, acc_ref):
    @pl.when(pl.program_id(2) == 0)
    def _init():
        acc_ref[...] = jnp.zeros_like(acc_ref)

    acc_ref[...] += jnp.dot(x_ref[...], w_ref[...],
                            preferred_element_type=jnp.float32)

    @pl.when(pl.program_id(2) == pl.num_programs(2) - 1)
    def _store():
        o_ref[...] = acc_ref[...].astype(o_ref.dtype)


def pallas_matmul(x, w, *, tm=256, tn=256, tk=512):
    """x: (M, K), w: (K, N) -> (M, N); pads M if needed, shrinks tn/tk to divisors."""
    M, K = x.shape
    K2, N = w.shape
    assert K == K2
    tn = min(tn, N)
    while N % tn:
        tn //= 2
    tk = min(tk, K)
    while K % tk:
        tk //= 2
    tm = min(tm, _round_up(M, 8))
    Mp = _round_up(M, tm)
    if Mp != M:
        x = jnp.pad(x, ((0, Mp - M), (0, 0)))

    out = pl.pallas_call(
        _matmul_kernel,
        grid=(Mp // tm, N // tn, K // tk),
        in_specs=[
            pl.BlockSpec((tm, tk), lambda i, j, k: (i, k)),
            pl.BlockSpec((tk, tn), lambda i, j, k: (k, j)),
        ],
        out_specs=pl.BlockSpec((tm, tn), lambda i, j, k: (i, j)),
        out_shape=jax.ShapeDtypeStruct((Mp, N), x.dtype),
        scratch_shapes=[pltpu.VMEM((tm, tn), jnp.float32)],
        compiler_params=pltpu.CompilerParams(
            dimension_semantics=("parallel", "parallel", "arbitrary"),
            vmem_limit_bytes=_vmem_limit_bytes(),
        ),
    )(x, w)
    return out[:M] if Mp != M else out


# --------------------------------------------------------------------------------------
# Heavy-hitter selection (in-kernel helper, pure jnp)
# --------------------------------------------------------------------------------------

def _topk_keep_mask(gattn, n_keep):
    """Boolean mask of the n_keep largest entries per row of gattn (TQ, Lk), f32."""
    TQ, Lk = gattn.shape

    if n_keep < 16:
        # Exact iterative partial top-k, lowest-index tie-break (matches stable argsort).
        col_ids = lax.broadcasted_iota(jnp.int32, (TQ, Lk), 1)

        def select_one(_, carry):
            w, keep = carry
            row_max = jnp.max(w, axis=-1, keepdims=True)
            first = jnp.min(jnp.where(w >= row_max, col_ids, Lk),
                            axis=-1, keepdims=True)
            sel = col_ids == first
            keep = keep | sel.astype(jnp.int32)
            w = jnp.where(sel, -jnp.inf, w)
            return w, keep

        _, keep = lax.fori_loop(
            0, n_keep, select_one,
            (gattn, jnp.zeros((TQ, Lk), jnp.int32)),
            unroll=True if n_keep <= 8 else 4)
        return keep > 0

    # Large heavy_const: fixed-pass per-row binary search for the n_keep-th largest value
    # on the monotone int32 image of the f32 scores, then a single threshold compare.
    # TODO(synk): exact float ties at the threshold are all kept (reference keeps only the
    #             lowest-index ones) -- measure zero for continuous activations.
    bits = pltpu.bitcast(gattn, jnp.int32)
    key = bits ^ ((bits >> 31) & 0x7FFFFFFF)          # monotone int32 image of the f32 value

    def search(_, carry):
        lo, hi = carry                                # (TQ, 1) int32, invariant lo <= T <= hi
        mid = (lo >> 1) + (hi >> 1) + ((lo | hi) & 1)  # overflow-free ceil((lo+hi)/2)
        cnt = jnp.sum((key >= mid).astype(jnp.int32), axis=-1, keepdims=True)
        ge = cnt >= n_keep
        return jnp.where(ge, mid, lo), jnp.where(ge, hi, mid - 1)

    lo0 = jnp.full((TQ, 1), jnp.iinfo(jnp.int32).min, jnp.int32)
    hi0 = jnp.full((TQ, 1), jnp.iinfo(jnp.int32).max, jnp.int32)
    thresh, _ = lax.fori_loop(0, 33, search, (lo0, hi0), unroll=2)
    return key >= thresh


# --------------------------------------------------------------------------------------
# Fused RoPE + grouped-score top-k + softmax + PV attention kernel
# --------------------------------------------------------------------------------------

def _hh_attn_kernel(q_ref, k_ref, v_ref, cosq_ref, sinq_ref, cosk_ref, sink_ref,
                    rot_ref, gmat_ref, o_ref, krot_ref, *,
                    n_rep, head_dim, heavy_const, dot_dtype):
    TQ = q_ref.shape[1]
    Lk = k_ref.shape[1]
    D = head_dim
    t = pl.program_id(2)

    rot_m = rot_ref[...]                              # (D, D): x @ rot_m == rotate_half(x)

    # t == 0: RoPE the full-length K of this kv head once and persist it across all
    # query tiles of this (batch, kv_head) -- the query-tile axis is innermost/arbitrary.
    @pl.when(t == 0)
    def _build_k():
        k_g = k_ref[0].astype(jnp.float32)            # (Lk, D)
        k_rot = (k_g * cosk_ref[...]
                 + jnp.dot(k_g, rot_m, preferred_element_type=jnp.float32) * sink_ref[...])
        krot_ref[...] = k_rot.astype(dot_dtype)

    k_rot = krot_ref[...]                             # (Lk, D), dot dtype
    v_g = v_ref[0]                                    # (Lk, D)
    cos_q = cosq_ref[...]                             # (TQ, D), 1/sqrt(D) pre-folded
    sin_q = sinq_ref[...]
    g_mat = gmat_ref[...].astype(dot_dtype)           # (D, D) block-diagonal group Gram

    n_keep = min(heavy_const, Lk)
    approx = dot_dtype == jnp.bfloat16

    outs = []
    for r in range(n_rep):
        q_h = q_ref[0, :, r * D:(r + 1) * D].astype(jnp.float32)      # (TQ, D)
        # RoPE (1/sqrt(D) already folded into cos_q/sin_q via the host-side tables).
        q_rot = (q_h * cos_q
                 + jnp.dot(q_h, rot_m, preferred_element_type=jnp.float32) * sin_q
                 ).astype(dot_dtype)
        # Grouped-channel query; top-k selection is invariant to the positive group scales.
        gq = jnp.dot(q_rot, g_mat, preferred_element_type=jnp.float32).astype(dot_dtype)

        # One fused (2*TQ, D) x (Lk, D)^T matmul -> [scores ; grouped scores], no
        # materialized transpose of k_rot.
        both = lax.dot_general(
            jnp.concatenate([q_rot, gq], axis=0), k_rot,
            dimension_numbers=(((1,), (1,)), ((), ())),
            preferred_element_type=jnp.float32)                        # (2*TQ, Lk)
        scores = both[:TQ]
        gattn = both[TQ:]

        if n_keep < Lk:
            keep = _topk_keep_mask(gattn, n_keep)
            scores = jnp.where(keep, scores, -jnp.inf)

        row_max = jnp.max(scores, axis=-1, keepdims=True)
        e = jnp.exp(scores - row_max)
        p = e * pl.reciprocal(jnp.sum(e, axis=-1, keepdims=True), approx=approx)
        outs.append(jnp.dot(p.astype(v_g.dtype), v_g,
                            preferred_element_type=jnp.float32))

    # Single lane-dense (TQ, n_rep*D) store for the whole kv group.
    o_ref[0] = jnp.concatenate(outs, axis=-1).astype(o_ref.dtype)


def pallas_heavy_hitter_attention(q, k, v, cos, sin, *, num_heads, num_kv_heads,
                                  head_dim, group_factor, heavy_const, q_tile=128):
    """q: (B, L, nH*D); k, v: (B, L, nKV*D). Output: (B, L, nH*D)."""
    B, L, _ = q.shape
    D = head_dim
    n_rep = num_heads // num_kv_heads
    TQ = L if L <= q_tile else q_tile
    assert L % TQ == 0

    sm_scale = 1.0 / math.sqrt(D)
    cos = cos.astype(jnp.float32)
    sin = sin.astype(jnp.float32)
    cos_q, sin_q = cos * sm_scale, sin * sm_scale      # fold 1/sqrt(D) into the q RoPE

    # rotate_half expressed as a tiny (D, D) matmul -> no in-kernel lane shuffles.
    half = D // 2
    ii = jnp.arange(D)[None, :]
    jj = jnp.arange(D)[:, None]
    rot_m = (jnp.where((ii < half) & (jj == ii + half), -1.0, 0.0)
             + jnp.where((ii >= half) & (jj == ii - half), 1.0, 0.0)).astype(jnp.float32)

    # Grouped-score Gram matrix: gattn == (q_rot @ G) @ k_rot^T; positive scales dropped
    # since the top-k selection is scale invariant.
    gidx = jnp.arange(D) // group_factor
    g_mat = (gidx[:, None] == gidx[None, :]).astype(jnp.float32)

    dot_dtype = jnp.bfloat16 if q.dtype == jnp.bfloat16 else jnp.float32
    kernel = functools.partial(_hh_attn_kernel, n_rep=n_rep, head_dim=D,
                               heavy_const=heavy_const, dot_dtype=dot_dtype)

    def _spec(shape, index_map, buffered):
        if buffered is None:
            return pl.BlockSpec(shape, index_map)
        return pl.BlockSpec(shape, index_map, pipeline_mode=buffered)

    def call(single_buffer):
        # Constant-along-t operands don't need double buffering -> halve their VMEM.
        cm = pl.Buffered(1) if single_buffer else None
        return pl.pallas_call(
            kernel,
            grid=(B, num_kv_heads, L // TQ),
            in_specs=[
                pl.BlockSpec((1, TQ, n_rep * D), lambda b, g, t: (b, t, g)),
                _spec((1, L, D), lambda b, g, t: (b, 0, g), cm),
                _spec((1, L, D), lambda b, g, t: (b, 0, g), cm),
                pl.BlockSpec((TQ, D), lambda b, g, t: (t, 0)),
                pl.BlockSpec((TQ, D), lambda b, g, t: (t, 0)),
                _spec((L, D), lambda b, g, t: (0, 0), cm),
                _spec((L, D), lambda b, g, t: (0, 0), cm),
                _spec((D, D), lambda b, g, t: (0, 0), cm),
                _spec((D, D), lambda b, g, t: (0, 0), cm),
            ],
            out_specs=pl.BlockSpec((1, TQ, n_rep * D), lambda b, g, t: (b, t, g)),
            out_shape=jax.ShapeDtypeStruct((B, L, num_heads * D), q.dtype),
            scratch_shapes=[pltpu.VMEM((L, D), dot_dtype)],   # RoPE'd K, persists over t
            compiler_params=pltpu.CompilerParams(
                dimension_semantics=("parallel", "parallel", "arbitrary"),
                vmem_limit_bytes=_vmem_limit_bytes(),
            ),
        )(q, k, v, cos_q, sin_q, cos, sin, rot_m, g_mat)

    try:
        return call(True)
    except Exception:
        # pl.Buffered(1) not supported by this jax/libtpu combo -> default buffering.
        return call(False)


# --------------------------------------------------------------------------------------
# Glue: RoPE tables + full forward
# --------------------------------------------------------------------------------------

def rope_cos_sin(seq_len, dim, theta):
    inv_freq = 1.0 / (theta ** (jnp.arange(0, dim, 2, dtype=jnp.float32) / dim))
    t = jnp.arange(seq_len, dtype=jnp.float32)
    freqs = jnp.outer(t, inv_freq)
    emb = jnp.concatenate([freqs, freqs], axis=-1)
    return jnp.cos(emb), jnp.sin(emb)


def prepare_params(params):
    """Hoisted out of the per-call forward: fuse the QKV weight once."""
    return dict(
        w_qkv=jnp.concatenate([params["wq"], params["wk"], params["wv"]], axis=1),
        wo=params["wo"],
    )


def mixtral_attention_heavy_hitter(hidden_states, fused_params, *, num_heads,
                                   num_kv_heads, head_dim, rope_theta, group_factor,
                                   heavy_const, q_tile=128):
    B, L, H = hidden_states.shape
    x2d = hidden_states.reshape(B * L, H)

    # Fused QKV projection: the activation is read from HBM once.
    qkv = pallas_matmul(x2d, fused_params["w_qkv"])
    q_sz = num_heads * head_dim
    kv_sz = num_kv_heads * head_dim
    q = qkv[:, :q_sz].reshape(B, L, q_sz)
    k = qkv[:, q_sz:q_sz + kv_sz].reshape(B, L, kv_sz)
    v = qkv[:, q_sz + kv_sz:].reshape(B, L, kv_sz)

    cos, sin = rope_cos_sin(L, head_dim, rope_theta)

    attn_out = pallas_heavy_hitter_attention(
        q, k, v, cos, sin, num_heads=num_heads, num_kv_heads=num_kv_heads,
        head_dim=head_dim, group_factor=group_factor, heavy_const=heavy_const,
        q_tile=q_tile)

    return pallas_matmul(attn_out.reshape(B * L, q_sz),
                         fused_params["wo"]).reshape(B, L, H)


# --------------------------------------------------------------------------------------
# Pure-JAX reference (mirrors the PyTorch forward, sorted_channel=None, eval mode)
# --------------------------------------------------------------------------------------

def _rotate_half(x):
    x1, x2 = jnp.split(x, 2, axis=-1)
    return jnp.concatenate([-x2, x1], axis=-1)


def reference_forward(x, params, *, num_heads, num_kv_heads, head_dim, rope_theta,
                      group_factor, heavy_const):
    B, L, H = x.shape
    x2d = x.reshape(B * L, H)
    q = (x2d @ params["wq"]).reshape(B, L, num_heads, head_dim).transpose(0, 2, 1, 3)
    k = (x2d @ params["wk"]).reshape(B, L, num_kv_heads, head_dim).transpose(0, 2, 1, 3)
    v = (x2d @ params["wv"]).reshape(B, L, num_kv_heads, head_dim).transpose(0, 2, 1, 3)

    cos, sin = rope_cos_sin(L, head_dim, rope_theta)
    cos_b, sin_b = cos[None, None], sin[None, None]
    q = q * cos_b + _rotate_half(q) * sin_b
    k = k * cos_b + _rotate_half(k) * sin_b

    n_rep = num_heads // num_kv_heads
    k = jnp.repeat(k, n_rep, axis=1)
    v = jnp.repeat(v, n_rep, axis=1)

    attn = jnp.einsum("bhqd,bhkd->bhqk", q, k) / math.sqrt(head_dim)

    DG = head_dim // group_factor
    gq = q.reshape(B, num_heads, L, DG, group_factor).sum(-1) / group_factor
    gk = k.reshape(B, num_heads, L, DG, group_factor).sum(-1) / group_factor
    gattn = jnp.einsum("bhqd,bhkd->bhqk", gq, gk) / math.sqrt(DG)

    idx = jnp.argsort(-gattn, axis=-1)
    keep_idx = idx[..., :heavy_const]
    keep = jnp.sum(jax.nn.one_hot(keep_idx, L, dtype=jnp.float32), axis=-2) > 0

    attn = jnp.where(keep, attn, -jnp.inf)
    p = jax.nn.softmax(attn, axis=-1)
    out = jnp.einsum("bhqk,bhkd->bhqd", p, v)
    out = out.transpose(0, 2, 1, 3).reshape(B, L, num_heads * head_dim)
    return out @ params["wo"]


# --------------------------------------------------------------------------------------
# Main
# --------------------------------------------------------------------------------------

if __name__ == "__main__":
    def run_case(name, *, B, L, hidden, nH, nKV, D, group_factor, heavy_const,
                 q_tile):
        key = jax.random.PRNGKey(0)
        kx, kq, kk, kv, ko = jax.random.split(key, 5)
        x = jax.random.normal(kx, (B, L, hidden), dtype=jnp.float32)
        params = dict(
            wq=0.02 * jax.random.normal(kq, (hidden, nH * D), dtype=jnp.float32),
            wk=0.02 * jax.random.normal(kk, (hidden, nKV * D), dtype=jnp.float32),
            wv=0.02 * jax.random.normal(kv, (hidden, nKV * D), dtype=jnp.float32),
            wo=0.02 * jax.random.normal(ko, (nH * D, hidden), dtype=jnp.float32),
        )
        fused = prepare_params(params)  # QKV weight concat hoisted out of the forward

        out = mixtral_attention_heavy_hitter(
            x, fused, num_heads=nH, num_kv_heads=nKV, head_dim=D,
            rope_theta=10000.0, group_factor=group_factor,
            heavy_const=heavy_const, q_tile=q_tile)
        out = jax.block_until_ready(out)

        ref = reference_forward(
            x, params, num_heads=nH, num_kv_heads=nKV, head_dim=D,
            rope_theta=10000.0, group_factor=group_factor, heavy_const=heavy_const)
        assert out.shape == (B, L, hidden)
        err = float(jnp.max(jnp.abs(out - ref)))
        assert jnp.allclose(out, ref, atol=2e-3, rtol=2e-3), (name, err)

    # Small config: iterative top-k path, single query tile, GQA with 2 kv heads on the grid.
    run_case("small", B=2, L=8, hidden=512, nH=4, nKV=2, D=128,
             group_factor=4, heavy_const=4, q_tile=128)
    # Larger heavy_const: exercises the threshold-select path plus multiple query tiles
    # reusing the persisted RoPE'd K of one kv head.
    run_case("threshold", B=1, L=64, hidden=256, nH=2, nKV=1, D=128,
             group_factor=8, heavy_const=16, q_tile=32)

    print("KERNEL_OK")
</pallas_src>

<mosaic_0001>
module attributes {stable_mosaic.version = 11 : i64} {
  func.func @_matmul_kernel(%arg0: i32, %arg1: i32, %arg2: i32, %arg3: memref<16x512xf32, #tpu.memory_space<vmem>>, %arg4: memref<512x256xf32, #tpu.memory_space<vmem>>, %arg5: memref<16x256xf32, #tpu.memory_space<vmem>>, %arg6: memref<16x256xf32, #tpu.memory_space<vmem>>) attributes {dimension_semantics = [#tpu.dimension_semantics<parallel>, #tpu.dimension_semantics<parallel>, #tpu.dimension_semantics<arbitrary>], iteration_bounds = array<i64: 1, 4, 1>, scalar_prefetch = 0 : i64, scratch_operands = 1 : i64, tpu.core_type = #tpu.core_type<tc>, window_params = [{transform_indices = @transform_0, window_bounds = array<i64: 16, 512>}, {transform_indices = @transform_1, window_bounds = array<i64: 512, 256>}, {transform_indices = @transform_2, window_bounds = array<i64: 16, 256>}]} {
    %c0_i32 = arith.constant 0 : i32
    %0 = arith.cmpi eq, %arg2, %c0_i32 : i32
    %1 = arith.extui %0 : i1 to i32
    %c0_i32_0 = arith.constant 0 : i32
    %2 = arith.cmpi ne, %1, %c0_i32_0 : i32
    scf.if %2 {
      %cst_10 = arith.constant 0.000000e+00 : f32
      %12 = vector.broadcast %cst_10 : f32 to vector<16x256xf32>
      %c0_11 = arith.constant 0 : index
      %c0_12 = arith.constant 0 : index
      %13 = vector.load %arg6[%c0_11, %c0_12] : memref<16x256xf32, #tpu.memory_space<vmem>>, vector<16x256xf32>
      tpu.vector_store %arg6[%c0_11, %c0_12], %12 {strides = array<i32>} : memref<16x256xf32, #tpu.memory_space<vmem>>, vector<16x256xf32>,
    } else {
    }
    %c0 = arith.constant 0 : index
    %c0_1 = arith.constant 0 : index
    %3 = vector.load %arg6[%c0, %c0_1] : memref<16x256xf32, #tpu.memory_space<vmem>>, vector<16x256xf32>
    %c0_2 = arith.constant 0 : index
    %c0_3 = arith.constant 0 : index
    %4 = vector.load %arg3[%c0_2, %c0_3] : memref<16x512xf32, #tpu.memory_space<vmem>>, vector<16x512xf32>
    %c0_4 = arith.constant 0 : index
    %c0_5 = arith.constant 0 : index
    %5 = vector.load %arg4[%c0_4, %c0_5] : memref<512x256xf32, #tpu.memory_space<vmem>>, vector<512x256xf32>
    %cst = arith.constant dense<0.000000e+00> : vector<16x256xf32>
    %6 = tpu.matmul %4, %5, %cst {dimension_numbers = #tpu.dot_dimension_numbers<[1], [0], [0], [1], [0, 0, 1, 1], [], []>} : vector<16x512xf32>, vector<512x256xf32>, vector<16x256xf32> -> vector<16x256xf32>
    %7 = arith.addf %3, %6 : vector<16x256xf32>
    %c0_6 = arith.constant 0 : index
    %c0_7 = arith.constant 0 : index
    %8 = vector.load %arg6[%c0_6, %c0_7] : memref<16x256xf32, #tpu.memory_space<vmem>>, vector<16x256xf32>
    tpu.vector_store %arg6[%c0_6, %c0_7], %7 {strides = array<i32>} : memref<16x256xf32, #tpu.memory_space<vmem>>, vector<16x256xf32>,
    %c0_i32_8 = arith.constant 0 : i32
    %9 = arith.cmpi eq, %arg2, %c0_i32_8 : i32
    %10 = arith.extui %9 : i1 to i32
    %c0_i32_9 = arith.constant 0 : i32
    %11 = arith.cmpi ne, %10, %c0_i32_9 : i32
    scf.if %11 {
      %c0_10 = arith.constant 0 : index
      %c0_11 = arith.constant 0 : index
      %12 = vector.load %arg6[%c0_10, %c0_11] : memref<16x256xf32, #tpu.memory_space<vmem>>, vector<16x256xf32>
      %c0_12 = arith.constant 0 : index
      %c0_13 = arith.constant 0 : index
      %13 = vector.load %arg5[%c0_12, %c0_13] : memref<16x256xf32, #tpu.memory_space<vmem>>, vector<16x256xf32>
      tpu.vector_store %arg5[%c0_12, %c0_13], %12 {strides = array<i32>} : memref<16x256xf32, #tpu.memory_space<vmem>>, vector<16x256xf32>,
    } else {
    }
    return
  }
  func.func @transform_0(%arg0: i32, %arg1: i32, %arg2: i32) -> (i32, i32) {
    %c0_i32 = arith.constant 0 : i32
    return %arg0, %arg2 : i32, i32
  }
  func.func @transform_1(%arg0: i32, %arg1: i32, %arg2: i32) -> (i32, i32) {
    %c0_i32 = arith.constant 0 : i32
    return %arg2, %arg1 : i32, i32
  }
  func.func @transform_2(%arg0: i32, %arg1: i32, %arg2: i32) -> (i32, i32) {
    %c0_i32 = arith.constant 0 : i32
    return %arg0, %arg1 : i32, i32
  }
}

</mosaic_0001>

<llo_original>
// kernel: tpu_custom_call.1
$region0: #{tpu_custom_call.1}
  #allocation0 [shape = 'u32[]', space=smem, size = 0x4, offset = 0x4, fixed_abs, tag = 'smem constant byte address 0x4 - core index']
  #allocation1 [shape = 'u32[72,128]{1,0:T(1,128)}', space=vmem, size = 0x9000, scoped, tag = 'internal scratch']
  #allocation2 [shape = 'f32[16,256]{1,0:T(8,128)}', space=vmem, size = 0x4000, scoped, tag = 'scratch operand']
  %s0 = inlined_call_operand.hbm [shape: f32[16,512], index: 0, kind: input, shape index: {}]
  %s1 = inlined_call_operand.hbm [shape: f32[512,1024], index: 1, kind: input, shape index: {}]
  %s2 = inlined_call_operand.hbm [shape: f32[16,1024], index: 2, kind: output, shape index: {}]
  %s3 = sld [smem:[#allocation0]]
  $region57: #{tpu_custom_call.1} parent=0
    _
  %s5 = ssub.s32 1, %s3
  %s6 = scalar_select 0, %s5, %s3
  $region1: #{tpu_custom_call.1} parent=0
    #allocation3 [shape = 'u8[32768]{0}', space=vmem, size = 0x8000, scoped, tag = 'input window, operand 0, single buffered']
    #allocation4 [shape = 's32[2]{0}', space=sflag, size = 0x8, scoped, tag = 'scoped memory for tpu_custom_call.1']
    #allocation5 [shape = 's32[2]{0}', space=sflag, size = 0x8, scoped, tag = 'scoped memory for tpu_custom_call.1']
    #allocation6 [shape = 'u8[1048576]{0}', space=vmem, size = 0x100000, scoped, tag = 'input window, operand 1']
    #allocation7 [shape = 's32[2]{0}', space=sflag, size = 0x8, scoped, tag = 'scoped memory for tpu_custom_call.1']
    #allocation8 [shape = 'u8[32768]{0}', space=vmem, size = 0x8000, scoped, tag = 'output window, operand 0']
    %7 = vsyncpa [#allocation4], 0
    %8 = vsyncpa [#allocation7], 0
    %s9 = scalar_lea.sflag [#allocation7], 1
    %10 = vsyncpa %s9, 0
    %11 = vsyncpa [#allocation5], 0
    %s12 = scalar_lea.sflag [#allocation5], 1
    %13 = vsyncpa %s12, 0
    loop: start=0, step=1, limit=6
    $region2: #{tpu_custom_call.1} parent=1 // loop_pre_header
      _
    $region3: #{tpu_custom_call.1} parent=1 // loop_header
      %s15 = sphi 0, %s19
      %p16 = scmp.ge.s32.totalorder %s15, 6
      %s22 = sphi 0, %s41
      %s23 = sphi 0, %s37
      %s24 = sphi 0, %s33
      %s25 = sphi 0, %s22
      %s26 = sphi 0, %s23
      %s27 = sphi 0, %s24
      %s28 = sphi 0, %s25
      %s29 = sphi 0, %s26
      %s30 = sphi 0, %s27
      %s46 = sphi 0, %s48
      %s49 = sphi 0, %s46
      %s50 = sphi 0, %s49
      %s66 = sphi 0, %s50
      %s74 = sphi 0, %s76
      %s77 = sphi 0, %s74
      %s78 = sphi 0, %s77
      %s94 = sphi 0, %s78
      %s102 = sphi 0, %s104
      %s105 = sphi 0, %s102
      %s106 = sphi 0, %s105
      %s122 = sphi 0, %s106
    $region4: #{tpu_custom_call.1} parent=1 // loop_header_branch
      %18 = sbr.rel (%p16) target = $region8
    $region5: #{tpu_custom_call.1} parent=1 // loop_body
      %s20 = ssub.s32 %s15, 1
      %s21 = ssub.s32 %s15, 2
      %s31 = sadd.s32 1, %s24
      %p32 = scmp.ge.s32.totalorder %s31, 1
      %s33 = scalar_select %p32, 0, %s31
      %s34 = sadd.s32 1, %s23
      %s35 = scalar_select %p32, %s34, %s23
      %p36 = scmp.ge.s32.totalorder %s35, 4
      %s37 = scalar_select %p36, 0, %s35
      %s38 = sadd.s32 1, %s22
      %s39 = scalar_select %p36, %s38, %s22
      %p40 = scmp.ge.s32.totalorder %s39, 1
      %s41 = scalar_select %p40, 0, %s39
      %s42 = ssub.s32 %s22, %s41
      %s43 = ssub.s32 %s24, %s33
      %s44 = sor.u32 %s42, %s43
      %p45 = scmp.eq.s32.totalorder %s44, 0
      %s47 = sadd.s32 %s46, 1
      %s48 = scalar_select %p45, %s46, %s47
      %p51 = pneg %p45
      %p52 = scmp.eq.s32.totalorder %s15, 3
      %p53 = por %p51, %p52
      %p54 = scmp.ne.s32.totalorder %s46, %s49
      %p55 = scmp.eq.s32.totalorder %s15, 0
      %p56 = por %p54, %p55
      %p57 = scmp.ne.s32.totalorder %s46, %s49
      %p58 = scmp.eq.s32.totalorder %s20, 3
      %p59 = por %p57, %p58
      %p60 = scmp.ne.s32.totalorder %s49, %s50
      %p61 = scmp.eq.s32.totalorder %s20, 0
      %p62 = por %p60, %p61
      %p63 = scmp.ne.s32.totalorder %s49, %s50
      %p64 = scmp.eq.s32.totalorder %s21, 3
      %p65 = por %p63, %p64
      %p67 = scmp.ne.s32.totalorder %s50, %s66
      %p68 = scmp.eq.s32.totalorder %s21, 0
      %p69 = por %p67, %p68
      %s70 = ssub.s32 %s24, %s33
      %s71 = ssub.s32 %s23, %s37
      %s72 = sor.u32 %s70, %s71
      %p73 = scmp.eq.s32.totalorder %s72, 0
      %s75 = sadd.s32 %s74, 1
      %s76 = scalar_select %p73, %s74, %s75
      %p79 = pneg %p73
      %p80 = scmp.eq.s32.totalorder %s15, 3
      %p81 = por %p79, %p80
      %p82 = scmp.ne.s32.totalorder %s74, %s77
      %p83 = scmp.eq.s32.totalorder %s15, 0
      %p84 = por %p82, %p83
      %p85 = scmp.ne.s32.totalorder %s74, %s77
      %p86 = scmp.eq.s32.totalorder %s20, 3
      %p87 = por %p85, %p86
      %p88 = scmp.ne.s32.totalorder %s77, %s78
      %p89 = scmp.eq.s32.totalorder %s20, 0
      %p90 = por %p88, %p89
      %p91 = scmp.ne.s32.totalorder %s77, %s78
      %p92 = scmp.eq.s32.totalorder %s21, 3
      %p93 = por %p91, %p92
      %p95 = scmp.ne.s32.totalorder %s78, %s94
      %p96 = scmp.eq.s32.totalorder %s21, 0
      %p97 = por %p95, %p96
      %s98 = ssub.s32 %s22, %s41
      %s99 = ssub.s32 %s23, %s37
      %s100 = sor.u32 %s98, %s99
      %p101 = scmp.eq.s32.totalorder %s100, 0
      %s103 = sadd.s32 %s102, 1
      %s104 = scalar_select %p101, %s102, %s103
      %p107 = pneg %p101
      %p108 = scmp.eq.s32.totalorder %s15, 3
      %p109 = por %p107, %p108
      %p110 = scmp.ne.s32.totalorder %s102, %s105
      %p111 = scmp.eq.s32.totalorder %s15, 0
      %p112 = por %p110, %p111
      %p113 = scmp.ne.s32.totalorder %s102, %s105
      %p114 = scmp.eq.s32.totalorder %s20, 3
      %p115 = por %p113, %p114
      %p116 = scmp.ne.s32.totalorder %s105, %s106
      %p117 = scmp.eq.s32.totalorder %s20, 0
      %p118 = por %p116, %p117
      %p119 = scmp.ne.s32.totalorder %s105, %s106
      %p120 = scmp.eq.s32.totalorder %s21, 3
      %p121 = por %p119, %p120
      %p123 = scmp.ne.s32.totalorder %s106, %s122
      %p124 = scmp.eq.s32.totalorder %s21, 0
      %p125 = por %p123, %p124
      %p126 = scmp.le.s32.totalorder 1, %s15
      %p127 = scmp.lt.s32.totalorder %s15, 5
      %p128 = pnand %p126, %p127
      %p129 = pneg %p128
      // Predicated region
      $region9: #{tpu_custom_call.1} parent=5 // pred_check
        _
      $region10: #{tpu_custom_call.1} parent=5 // pred_check_branch
        %131 = sbr.rel (%p128) target = $region12
      $region11: #{tpu_custom_call.1} parent=5 // pred_region
        %s132 = ssub.s32 %s15, 1
        // Predicated region
        $region13: #{tpu_custom_call.1} parent=11 // pred_check
          %p133 = pneg %p62
        $region14: #{tpu_custom_call.1} parent=11 // pred_check_branch
          %135 = sbr.rel (%p133) target = $region16
        $region15: #{tpu_custom_call.1} parent=11 // pred_region
          %s136 = smul.u32 2, %s25
          %s137 = smul.u32 4, %s27
          %139 = vsyncadd [#allocation4], 0
          %s140 = smul.addr %s136, 4
          %s141 = sadd.s32 %s137, %s140
          %s142 = smul.addr %s141, 8
          %s143 = scalar_lea.hbm %s0, %s142
          %s144 = sshll.u32 %s143, 4
          %s145 = int_to_ptr.hbm [resolvable:$true] %s144
          %s146 = sshll.u32 [#allocation3], 4
          %s147 = int_to_ptr.vmem [resolvable:$true] %s146
          %152 = dma.hbm_to_vmem [thread:$0]  %s145, 1024, %s147, [#allocation4], 512, 512, 32
        $region16: #{tpu_custom_call.1} parent=11 // pred_fallthru
          _
      $region12: #{tpu_custom_call.1} parent=5 // pred_fallthru
        _
      %p153 = scmp.lt.s32.totalorder %s15, 4
      // Predicated region
      $region17: #{tpu_custom_call.1} parent=5 // pred_check
        %p154 = pneg %p153
      $region18: #{tpu_custom_call.1} parent=5 // pred_check_branch
        %156 = sbr.rel (%p154) target = $region20
      $region19: #{tpu_custom_call.1} parent=5 // pred_region
        // Predicated region
        $region21: #{tpu_custom_call.1} parent=19 // pred_check
          %p157 = pneg %p84
        $region22: #{tpu_custom_call.1} parent=19 // pred_check_branch
          %159 = sbr.rel (%p157) target = $region24
        $region23: #{tpu_custom_call.1} parent=19 // pred_region
          %s160 = sand.u32 %s74, 1
          %s161 = scalar_lea.sflag [#allocation7], %s160
          %s162 = sand.u32 %s74, 1
          %s163 = smul.addr %s162, 1024
          %s164 = scalar_lea.vmem [#allocation6], %s163
          %s165 = smul.u32 64, %s24
          %s166 = smul.u32 2, %s23
          %168 = vsyncadd %s161, 0
          %s169 = smul.addr %s165, 8
          %s170 = sadd.s32 %s166, %s169
          %s171 = smul.addr %s170, 8
          %s172 = scalar_lea.hbm %s1, %s171
          %s173 = sshll.u32 %s172, 4
          %s174 = int_to_ptr.hbm [resolvable:$true] %s173
          %s175 = sshll.u32 %s164, 4
          %s176 = int_to_ptr.vmem [resolvable:$true] %s175
          %181 = dma.hbm_to_vmem [thread:$0]  %s174, 16384, %s176, %s161, 1024, 256, 16
        $region24: #{tpu_custom_call.1} parent=19 // pred_fallthru
          _
      $region20: #{tpu_custom_call.1} parent=5 // pred_fallthru
        _
      %p182 = scmp.le.s32.totalorder 1, %s15
      %p183 = scmp.lt.s32.totalorder %s15, 5
      %p184 = pnand %p182, %p183
      %p185 = pneg %p184
      // Predicated region
      $region25: #{tpu_custom_call.1} parent=5 // pred_check
        _
      $region26: #{tpu_custom_call.1} parent=5 // pred_check_branch
        %187 = sbr.rel (%p184) target = $region28
      $region27: #{tpu_custom_call.1} parent=5 // pred_region
        %s188 = ssub.s32 %s15, 1
        // Predicated region
        $region29: #{tpu_custom_call.1} parent=27 // pred_check
          %p189 = pneg %p62
        $region30: #{tpu_custom_call.1} parent=27 // pred_check_branch
          %191 = sbr.rel (%p189) target = $region32
        $region31: #{tpu_custom_call.1} parent=27 // pred_region
          %193 = dma.done [#allocation4], 1024
        $region32: #{tpu_custom_call.1} parent=27 // pred_fallthru
          _
        %s194 = sand.u32 %s77, 1
        %s195 = scalar_lea.sflag [#allocation7], %s194
        %s196 = sand.u32 %s77, 1
        %s197 = smul.addr %s196, 1024
        %s198 = scalar_lea.vmem [#allocation6], %s197
        // Predicated region
        $region33: #{tpu_custom_call.1} parent=27 // pred_check
          %p199 = pneg %p90
        $region34: #{tpu_custom_call.1} parent=27 // pred_check_branch
          %201 = sbr.rel (%p199) target = $region36
        $region35: #{tpu_custom_call.1} parent=27 // pred_region
          %203 = dma.done %s195, 16384
        $region36: #{tpu_custom_call.1} parent=27 // pred_fallthru
          _
        %p204 = pneg %p62
        %p205 = pneg %p59
        %s206 = sand.u32 %s77, 1
        %s207 = scalar_lea.sflag [#allocation7], %s206
        %s208 = sand.u32 %s77, 1
        %s209 = smul.addr %s208, 1024
        %s210 = scalar_lea.vmem [#allocation6], %s209
        %p211 = pneg %p90
        %p212 = pneg %p87
        %p213 = pneg %p118
        %p214 = pneg %p115
        %s215 = sand.u32 %s105, 1
        %s216 = scalar_lea.sflag [#allocation5], %s215
        %s217 = sand.u32 %s105, 1
        %s218 = smul.addr %s217, 32
        %s219 = scalar_lea.vmem [#allocation8], %s218
        %s220 = smul.u32 2, %s25
        %s221 = smul.u32 4, %s27
        %s222 = smul.u32 64, %s27
        %s223 = smul.u32 2, %s26
        %s224 = smul.u32 2, %s25
        %s225 = smul.u32 2, %s26
        %p226 = scmp.eq.s32.totalorder %s27, 0
        // Predicated region
        $region37: #{tpu_custom_call.1} parent=27 // pred_check
          %p227 = pneg %p226
        $region38: #{tpu_custom_call.1} parent=27 // pred_check_branch
          %229 = sbr.rel (%p227) target = $region40
        $region39: #{tpu_custom_call.1} parent=27 // pred_region
          %230 = vst [vmem:[#allocation2] sm:$0xff] 0.0
          %231 = vst [vmem:[#allocation2 + $0x8] sm:$0xff] 0.0
          %232 = vst [vmem:[#allocation2 + $0x10] sm:$0xff] 0.0
          %233 = vst [vmem:[#allocation2 + $0x18] sm:$0xff] 0.0
        $region40: #{tpu_custom_call.1} parent=27 // pred_fallthru
          _
        %v234 = vld [vmem:[#allocation2] sm:$0xff]
        %v235 = vld [vmem:[#allocation2 + $0x8] sm:$0xff]
        %v236 = vld [vmem:[#allocation2 + $0x10] sm:$0xff]
        %v237 = vld [vmem:[#allocation2 + $0x18] sm:$0xff]
        %v238 = vld [vmem:[#allocation3] sm:$0xff]
        %v239 = vld [vmem:[#allocation3 + $0x8] sm:$0xff]
        %v240 = vld [vmem:[#allocation3 + $0x10] sm:$0xff]
        %v241 = vld [vmem:[#allocation3 + $0x18] sm:$0xff]
        %v242 = vld [vmem:[#allocation3 + $0x20] sm:$0xff]
        %v243 = vld [vmem:[#allocation3 + $0x28] sm:$0xff]
        %v244 = vld [vmem:[#allocation3 + $0x30] sm:$0xff]
        %v245 = vld [vmem:[#allocation3 + $0x38] sm:$0xff]
        %v246 = vld [vmem:[%s198] sm:$0xff]
        %v247 = vld [vmem:[%s198 + $0x8] sm:$0xff]
        %v248 = vld [vmem:[%s198 + $0x10] sm:$0xff]
        %v249 = vld [vmem:[%s198 + $0x18] sm:$0xff]
        %v250 = vld [vmem:[%s198 + $0x20] sm:$0xff]
        %v251 = vld [vmem:[%s198 + $0x28] sm:$0xff]
        %v252 = vld [vmem:[%s198 + $0x30] sm:$0xff]
        %v253 = vld [vmem:[%s198 + $0x38] sm:$0xff]
        %v254 = vld [vmem:[%s198 + $0x40] sm:$0xff]
        %v255 = vld [vmem:[%s198 + $0x48] sm:$0xff]
        %v256 = vld [vmem:[%s198 + $0x50] sm:$0xff]
        %v257 = vld [vmem:[%s198 + $0x58] sm:$0xff]
        %v258 = vld [vmem:[%s198 + $0x60] sm:$0xff]
        %v259 = vld [vmem:[%s198 + $0x68] sm:$0xff]
        %v260 = vld [vmem:[%s198 + $0x70] sm:$0xff]
        %v261 = vld [vmem:[%s198 + $0x78] sm:$0xff]
        %v262 = vld [vmem:[%s198 + $0x80] sm:$0xff]
        %v263 = vld [vmem:[%s198 + $0x88] sm:$0xff]
        %v264 = vld [vmem:[%s198 + $0x90] sm:$0xff]
        %v265 = vld [vmem:[%s198 + $0x98] sm:$0xff]
        %v266 = vld [vmem:[%s198 + $0xa0] sm:$0xff]
        %v267 = vld [vmem:[%s198 + $0xa8] sm:$0xff]
        %v268 = vld [vmem:[%s198 + $0xb0] sm:$0xff]
        %v269 = vld [vmem:[%s198 + $0xb8] sm:$0xff]
        %v270 = vld [vmem:[%s198 + $0xc0] sm:$0xff]
        %v271 = vld [vmem:[%s198 + $0xc8] sm:$0xff]
        %v272 = vld [vmem:[%s198 + $0xd0] sm:$0xff]
        %v273 = vld [vmem:[%s198 + $0xd8] sm:$0xff]
        %v274 = vld [vmem:[%s198 + $0xe0] sm:$0xff]
        %v275 = vld [vmem:[%s198 + $0xe8] sm:$0xff]
        %v276 = vld [vmem:[%s198 + $0xf0] sm:$0xff]
        %v277 = vld [vmem:[%s198 + $0xf8] sm:$0xff]
        %v278 = vld [vmem:[%s198 + $0x100] sm:$0xff]
        %v279 = vld [vmem:[%s198 + $0x108] sm:$0xff]
        %v280 = vld [vmem:[%s198 + $0x110] sm:$0xff]
        %v281 = vld [vmem:[%s198 + $0x118] sm:$0xff]
        %v282 = vld [vmem:[%s198 + $0x120] sm:$0xff]
        %v283 = vld [vmem:[%s198 + $0x128] sm:$0xff]
        %v284 = vld [vmem:[%s198 + $0x130] sm:$0xff]
        %v285 = vld [vmem:[%s198 + $0x138] sm:$0xff]
        %v286 = vld [vmem:[%s198 + $0x140] sm:$0xff]
        %v287 = vld [vmem:[%s198 + $0x148] sm:$0xff]
        %v288 = vld [vmem:[%s198 + $0x150] sm:$0xff]
        %v289 = vld [vmem:[%s198 + $0x158] sm:$0xff]
        %v290 = vld [vmem:[%s198 + $0x160] sm:$0xff]
        %v291 = vld [vmem:[%s198 + $0x168] sm:$0xff]
        %v292 = vld [vmem:[%s198 + $0x170] sm:$0xff]
        %v293 = vld [vmem:[%s198 + $0x178] sm:$0xff]
        %v294 = vld [vmem:[%s198 + $0x180] sm:$0xff]
        %v295 = vld [vmem:[%s198 + $0x188] sm:$0xff]
        %v296 = vld [vmem:[%s198 + $0x190] sm:$0xff]
        %v297 = vld [vmem:[%s198 + $0x198] sm:$0xff]
        %v298 = vld [vmem:[%s198 + $0x1a0] sm:$0xff]
        %v299 = vld [vmem:[%s198 + $0x1a8] sm:$0xff]
        %v300 = vld [vmem:[%s198 + $0x1b0] sm:$0xff]
        %v301 = vld [vmem:[%s198 + $0x1b8] sm:$0xff]
        %v302 = vld [vmem:[%s198 + $0x1c0] sm:$0xff]
        %v303 = vld [vmem:[%s198 + $0x1c8] sm:$0xff]
        %v304 = vld [vmem:[%s198 + $0x1d0] sm:$0xff]
        %v305 = vld [vmem:[%s198 + $0x1d8] sm:$0xff]
        %v306 = vld [vmem:[%s198 + $0x1e0] sm:$0xff]
        %v307 = vld [vmem:[%s198 + $0x1e8] sm:$0xff]
        %v308 = vld [vmem:[%s198 + $0x1f0] sm:$0xff]
        %v309 = vld [vmem:[%s198 + $0x1f8] sm:$0xff]
        %v310 = vld [vmem:[%s198 + $0x200] sm:$0xff]
        %v311 = vld [vmem:[%s198 + $0x208] sm:$0xff]
        %v312 = vld [vmem:[%s198 + $0x210] sm:$0xff]
        %v313 = vld [vmem:[%s198 + $0x218] sm:$0xff]
        %v314 = vld [vmem:[%s198 + $0x220] sm:$0xff]
        %v315 = vld [vmem:[%s198 + $0x228] sm:$0xff]
        %v316 = vld [vmem:[%s198 + $0x230] sm:$0xff]
        %v317 = vld [vmem:[%s198 + $0x238] sm:$0xff]
        %v318 = vld [vmem:[%s198 + $0x240] sm:$0xff]
        %v319 = vld [vmem:[%s198 + $0x248] sm:$0xff]
        %v320 = vld [vmem:[%s198 + $0x250] sm:$0xff]
        %v321 = vld [vmem:[%s198 + $0x258] sm:$0xff]
        %v322 = vld [vmem:[%s198 + $0x260] sm:$0xff]
        %v323 = vld [vmem:[%s198 + $0x268] sm:$0xff]
        %v324 = vld [vmem:[%s198 + $0x270] sm:$0xff]
        %v325 = vld [vmem:[%s198 + $0x278] sm:$0xff]
        %v326 = vld [vmem:[%s198 + $0x280] sm:$0xff]
        %v327 = vld [vmem:[%s198 + $0x288] sm:$0xff]
        %v328 = vld [vmem:[%s198 + $0x290] sm:$0xff]
        %v329 = vld [vmem:[%s198 + $0x298] sm:$0xff]
        %v330 = vld [vmem:[%s198 + $0x2a0] sm:$0xff]
        %v331 = vld [vmem:[%s198 + $0x2a8] sm:$0xff]
        %v332 = vld [vmem:[%s198 + $0x2b0] sm:$0xff]
        %v333 = vld [vmem:[%s198 + $0x2b8] sm:$0xff]
        %v334 = vld [vmem:[%s198 + $0x2c0] sm:$0xff]
        %v335 = vld [vmem:[%s198 + $0x2c8] sm:$0xff]
        %v336 = vld [vmem:[%s198 + $0x2d0] sm:$0xff]
        %v337 = vld [vmem:[%s198 + $0x2d8] sm:$0xff]
        %v338 = vld [vmem:[%s198 + $0x2e0] sm:$0xff]
        %v339 = vld [vmem:[%s198 + $0x2e8] sm:$0xff]
        %v340 = vld [vmem:[%s198 + $0x2f0] sm:$0xff]
        %v341 = vld [vmem:[%s198 + $0x2f8] sm:$0xff]
        %v342 = vld [vmem:[%s198 + $0x300] sm:$0xff]
        %v343 = vld [vmem:[%s198 + $0x308] sm:$0xff]
        %v344 = vld [vmem:[%s198 + $0x310] sm:$0xff]
        %v345 = vld [vmem:[%s198 + $0x318] sm:$0xff]
        %v346 = vld [vmem:[%s198 + $0x320] sm:$0xff]
        %v347 = vld [vmem:[%s198 + $0x328] sm:$0xff]
        %v348 = vld [vmem:[%s198 + $0x330] sm:$0xff]
        %v349 = vld [vmem:[%s198 + $0x338] sm:$0xff]
        %v350 = vld [vmem:[%s198 + $0x340] sm:$0xff]
        %v351 = vld [vmem:[%s198 + $0x348] sm:$0xff]
        %v352 = vld [vmem:[%s198 + $0x350] sm:$0xff]
        %v353 = vld [vmem:[%s198 + $0x358] sm:$0xff]
        %v354 = vld [vmem:[%s198 + $0x360] sm:$0xff]
        %v355 = vld [vmem:[%s198 + $0x368] sm:$0xff]
        %v356 = vld [vmem:[%s198 + $0x370] sm:$0xff]
        %v357 = vld [vmem:[%s198 + $0x378] sm:$0xff]
        %v358 = vld [vmem:[%s198 + $0x380] sm:$0xff]
        %v359 = vld [vmem:[%s198 + $0x388] sm:$0xff]
        %v360 = vld [vmem:[%s198 + $0x390] sm:$0xff]
        %v361 = vld [vmem:[%s198 + $0x398] sm:$0xff]
        %v362 = vld [vmem:[%s198 + $0x3a0] sm:$0xff]
        %v363 = vld [vmem:[%s198 + $0x3a8] sm:$0xff]
        %v364 = vld [vmem:[%s198 + $0x3b0] sm:$0xff]
        %v365 = vld [vmem:[%s198 + $0x3b8] sm:$0xff]
        %v366 = vld [vmem:[%s198 + $0x3c0] sm:$0xff]
        %v367 = vld [vmem:[%s198 + $0x3c8] sm:$0xff]
        %v368 = vld [vmem:[%s198 + $0x3d0] sm:$0xff]
        %v369 = vld [vmem:[%s198 + $0x3d8] sm:$0xff]
        %v370 = vld [vmem:[%s198 + $0x3e0] sm:$0xff]
        %v371 = vld [vmem:[%s198 + $0x3e8] sm:$0xff]
        %v372 = vld [vmem:[%s198 + $0x3f0] sm:$0xff]
        %v373 = vld [vmem:[%s198 + $0x3f8] sm:$0xff]
        %374 = vmatpush.msra.mxu0 %v276
        %375 = vmatpush.msra.mxu0 %v274
        %376 = vmatpush.msra.mxu0 %v272
        %377 = vmatpush.msra.mxu0 %v270
        %378 = vmatpush.msra.mxu0 %v268
        %379 = vmatpush.msra.mxu0 %v266
        %380 = vmatpush.msra.mxu0 %v264
        %381 = vmatpush.msra.mxu0 %v262
        %382 = vmatpush.msra.mxu0 %v260
        %383 = vmatpush.msra.mxu0 %v258
        %384 = vmatpush.msra.mxu0 %v256
        %385 = vmatpush.msra.mxu0 %v254
        %386 = vmatpush.msra.mxu0 %v252
        %387 = vmatpush.msra.mxu0 %v250
        %388 = vmatpush.msra.mxu0 %v248
        %389 = vmatpush.msra.mxu0 %v246
        %390 = vmatmul.f32.gmra.mxu0 %v238
        %v391 = vpop.f32.mrf.mxu0
        %v392 = vadd.f32 0.0, %v391
        %393 = vmatmul.f32.gmra.mxu0 %v242
        %v394 = vpop.f32.mrf.mxu0
        %v395 = vadd.f32 0.0, %v394
        %396 = vdwg.mxu0
        %397 = vmatpush.msra.mxu0 %v308
        %398 = vmatpush.msra.mxu0 %v306
        %399 = vmatpush.msra.mxu0 %v304
        %400 = vmatpush.msra.mxu0 %v302
        %401 = vmatpush.msra.mxu0 %v300
        %402 = vmatpush.msra.mxu0 %v298
        %403 = vmatpush.msra.mxu0 %v296
        %404 = vmatpush.msra.mxu0 %v294
        %405 = vmatpush.msra.mxu0 %v292
        %406 = vmatpush.msra.mxu0 %v290
        %407 = vmatpush.msra.mxu0 %v288
        %408 = vmatpush.msra.mxu0 %v286
        %409 = vmatpush.msra.mxu0 %v284
        %410 = vmatpush.msra.mxu0 %v282
        %411 = vmatpush.msra.mxu0 %v280
        %412 = vmatpush.msra.mxu0 %v278
        %413 = vmatmul.f32.gmra.mxu0 %v239
        %v414 = vpop.f32.mrf.mxu0
        %v415 = vadd.f32 %v392, %v414
        %416 = vmatmul.f32.gmra.mxu0 %v243
        %v417 = vpop.f32.mrf.mxu0
        %v418 = vadd.f32 %v395, %v417
        %419 = vdwg.mxu0
        %420 = vmatpush.msra.mxu0 %v340
        %421 = vmatpush.msra.mxu0 %v338
        %422 = vmatpush.msra.mxu0 %v336
        %423 = vmatpush.msra.mxu0 %v334
        %424 = vmatpush.msra.mxu0 %v332
        %425 = vmatpush.msra.mxu0 %v330
        %426 = vmatpush.msra.mxu0 %v328
        %427 = vmatpush.msra.mxu0 %v326
        %428 = vmatpush.msra.mxu0 %v324
        %429 = vmatpush.msra.mxu0 %v322
        %430 = vmatpush.msra.mxu0 %v320
        %431 = vmatpush.msra.mxu0 %v318
        %432 = vmatpush.msra.mxu0 %v316
        %433 = vmatpush.msra.mxu0 %v314
        %434 = vmatpush.msra.mxu0 %v312
        %435 = vmatpush.msra.mxu0 %v310
        %436 = vmatmul.f32.gmra.mxu0 %v240
        %v437 = vpop.f32.mrf.mxu0
        %v438 = vadd.f32 %v415, %v437
        %439 = vmatmul.f32.gmra.mxu0 %v244
        %v440 = vpop.f32.mrf.mxu0
        %v441 = vadd.f32 %v418, %v440
        %442 = vdwg.mxu0
        %443 = vmatpush.msra.mxu0 %v372
        %444 = vmatpush.msra.mxu0 %v370
        %445 = vmatpush.msra.mxu0 %v368
        %446 = vmatpush.msra.mxu0 %v366
        %447 = vmatpush.msra.mxu0 %v364
        %448 = vmatpush.msra.mxu0 %v362
        %449 = vmatpush.msra.mxu0 %v360
        %450 = vmatpush.msra.mxu0 %v358
        %451 = vmatpush.msra.mxu0 %v356
        %452 = vmatpush.msra.mxu0 %v354
        %453 = vmatpush.msra.mxu0 %v352
        %454 = vmatpush.msra.mxu0 %v350
        %455 = vmatpush.msra.mxu0 %v348
        %456 = vmatpush.msra.mxu0 %v346
        %457 = vmatpush.msra.mxu0 %v344
        %458 = vmatpush.msra.mxu0 %v342
        %459 = vmatmul.f32.gmra.mxu0 %v241
        %v460 = vpop.f32.mrf.mxu0
        %v461 = vadd.f32 %v438, %v460
        %462 = vmatmul.f32.gmra.mxu0 %v245
        %v463 = vpop.f32.mrf.mxu0
        %v464 = vadd.f32 %v441, %v463
        %465 = vdwg.mxu0
        %466 = vmatpush.msra.mxu0 %v277
        %467 = vmatpush.msra.mxu0 %v275
        %468 = vmatpush.msra.mxu0 %v273
        %469 = vmatpush.msra.mxu0 %v271
        %470 = vmatpush.msra.mxu0 %v269
        %471 = vmatpush.msra.mxu0 %v267
        %472 = vmatpush.msra.mxu0 %v265
        %473 = vmatpush.msra.mxu0 %v263
        %474 = vmatpush.msra.mxu0 %v261
        %475 = vmatpush.msra.mxu0 %v259
        %476 = vmatpush.msra.mxu0 %v257
        %477 = vmatpush.msra.mxu0 %v255
        %478 = vmatpush.msra.mxu0 %v253
        %479 = vmatpush.msra.mxu0 %v251
        %480 = vmatpush.msra.mxu0 %v249
        %481 = vmatpush.msra.mxu0 %v247
        %482 = vmatmul.f32.gmra.mxu0 %v238
        %v483 = vpop.f32.mrf.mxu0
        %v484 = vadd.f32 0.0, %v483
        %485 = vmatmul.f32.gmra.mxu0 %v242
        %v486 = vpop.f32.mrf.mxu0
        %v487 = vadd.f32 0.0, %v486
        %488 = vdwg.mxu0
        %489 = vmatpush.msra.mxu0 %v309
        %490 = vmatpush.msra.mxu0 %v307
        %491 = vmatpush.msra.mxu0 %v305
        %492 = vmatpush.msra.mxu0 %v303
        %493 = vmatpush.msra.mxu0 %v301
        %494 = vmatpush.msra.mxu0 %v299
        %495 = vmatpush.msra.mxu0 %v297
        %496 = vmatpush.msra.mxu0 %v295
        %497 = vmatpush.msra.mxu0 %v293
        %498 = vmatpush.msra.mxu0 %v291
        %499 = vmatpush.msra.mxu0 %v289
        %500 = vmatpush.msra.mxu0 %v287
        %501 = vmatpush.msra.mxu0 %v285
        %502 = vmatpush.msra.mxu0 %v283
        %503 = vmatpush.msra.mxu0 %v281
        %504 = vmatpush.msra.mxu0 %v279
        %505 = vmatmul.f32.gmra.mxu0 %v239
        %v506 = vpop.f32.mrf.mxu0
        %v507 = vadd.f32 %v484, %v506
        %508 = vmatmul.f32.gmra.mxu0 %v243
        %v509 = vpop.f32.mrf.mxu0
        %v510 = vadd.f32 %v487, %v509
        %511 = vdwg.mxu0
        %512 = vmatpush.msra.mxu0 %v341
        %513 = vmatpush.msra.mxu0 %v339
        %514 = vmatpush.msra.mxu0 %v337
        %515 = vmatpush.msra.mxu0 %v335
        %516 = vmatpush.msra.mxu0 %v333
        %517 = vmatpush.msra.mxu0 %v331
        %518 = vmatpush.msra.mxu0 %v329
        %519 = vmatpush.msra.mxu0 %v327
        %520 = vmatpush.msra.mxu0 %v325
        %521 = vmatpush.msra.mxu0 %v323
        %522 = vmatpush.msra.mxu0 %v321
        %523 = vmatpush.msra.mxu0 %v319
        %524 = vmatpush.msra.mxu0 %v317
        %525 = vmatpush.msra.mxu0 %v315
        %526 = vmatpush.msra.mxu0 %v313
        %527 = vmatpush.msra.mxu0 %v311
        %528 = vmatmul.f32.gmra.mxu0 %v240
        %v529 = vpop.f32.mrf.mxu0
        %v530 = vadd.f32 %v507, %v529
        %531 = vmatmul.f32.gmra.mxu0 %v244
        %v532 = vpop.f32.mrf.mxu0
        %v533 = vadd.f32 %v510, %v532
        %534 = vdwg.mxu0
        %535 = vmatpush.msra.mxu0 %v373
        %536 = vmatpush.msra.mxu0 %v371
        %537 = vmatpush.msra.mxu0 %v369
        %538 = vmatpush.msra.mxu0 %v367
        %539 = vmatpush.msra.mxu0 %v365
        %540 = vmatpush.msra.mxu0 %v363
        %541 = vmatpush.msra.mxu0 %v361
        %542 = vmatpush.msra.mxu0 %v359
        %543 = vmatpush.msra.mxu0 %v357
        %544 = vmatpush.msra.mxu0 %v355
        %545 = vmatpush.msra.mxu0 %v353
        %546 = vmatpush.msra.mxu0 %v351
        %547 = vmatpush.msra.mxu0 %v349
        %548 = vmatpush.msra.mxu0 %v347
        %549 = vmatpush.msra.mxu0 %v345
        %550 = vmatpush.msra.mxu0 %v343
        %551 = vmatmul.f32.gmra.mxu0 %v241
        %v552 = vpop.f32.mrf.mxu0
        %v553 = vadd.f32 %v530, %v552
        %554 = vmatmul.f32.gmra.mxu0 %v245
        %v555 = vpop.f32.mrf.mxu0
        %v556 = vadd.f32 %v533, %v555
        %557 = vdwg.mxu0
        %v558 = vadd.f32 %v234, %v461
        %v559 = vadd.f32 %v235, %v553
        %v560 = vadd.f32 %v236, %v464
        %v561 = vadd.f32 %v237, %v556
        %562 = vst [vmem:[#allocation2] sm:$0xff] %v558
        %563 = vst [vmem:[#allocation2 + $0x8] sm:$0xff] %v559
        %564 = vst [vmem:[#allocation2 + $0x10] sm:$0xff] %v560
        %565 = vst [vmem:[#allocation2 + $0x18] sm:$0xff] %v561
        // Predicated region
        $region41: #{tpu_custom_call.1} parent=27 // pred_check
          %p566 = pneg %p226
        $region42: #{tpu_custom_call.1} parent=27 // pred_check_branch
          %568 = sbr.rel (%p566) target = $region44
        $region43: #{tpu_custom_call.1} parent=27 // pred_region
          %v569 = vld [vmem:[#allocation2] sm:$0xff]
          %v570 = vld [vmem:[#allocation2 + $0x8] sm:$0xff]
          %v571 = vld [vmem:[#allocation2 + $0x10] sm:$0xff]
          %v572 = vld [vmem:[#allocation2 + $0x18] sm:$0xff]
          %573 = vst [vmem:[%s219] sm:$0xff] %v569
          %574 = vst [vmem:[%s219 + $0x8] sm:$0xff] %v570
          %575 = vst [vmem:[%s219 + $0x10] sm:$0xff] %v571
          %576 = vst [vmem:[%s219 + $0x18] sm:$0xff] %v572
        $region44: #{tpu_custom_call.1} parent=27 // pred_fallthru
          _
        %s577 = sand.u32 %s105, 1
        %s578 = scalar_lea.sflag [#allocation5], %s577
        %s579 = sand.u32 %s105, 1
        %s580 = smul.addr %s579, 32
        %s581 = scalar_lea.vmem [#allocation8], %s580
        // Predicated region
        $region45: #{tpu_custom_call.1} parent=27 // pred_check
          %p582 = pneg %p115
        $region46: #{tpu_custom_call.1} parent=27 // pred_check_branch
          %584 = sbr.rel (%p582) target = $region48
        $region47: #{tpu_custom_call.1} parent=27 // pred_region
          %s585 = smul.u32 2, %s25
          %s586 = smul.u32 2, %s26
          %588 = vsyncadd %s578, 0
          %s589 = smul.addr %s585, 8
          %s590 = sadd.s32 %s586, %s589
          %s591 = smul.addr %s590, 8
          %s592 = scalar_lea.hbm %s2, %s591
          %s593 = sshll.u32 %s581, 4
          %s594 = int_to_ptr.vmem [resolvable:$true] %s593
          %s595 = sshll.u32 %s592, 4
          %s596 = int_to_ptr.hbm [resolvable:$true] %s595
          %601 = dma.vmem_to_hbm [thread:$0]  %s594, 512, %s596, %s578, 256, 1024, 16
        $region48: #{tpu_custom_call.1} parent=27 // pred_fallthru
          _
      $region28: #{tpu_custom_call.1} parent=5 // pred_fallthru
        _
      %p602 = scmp.le.s32.totalorder 2, %s15
      // Predicated region
      $region49: #{tpu_custom_call.1} parent=5 // pred_check
        %p603 = pneg %p602
      $region50: #{tpu_custom_call.1} parent=5 // pred_check_branch
        %605 = sbr.rel (%p603) target = $region52
      $region51: #{tpu_custom_call.1} parent=5 // pred_region
        %s606 = ssub.s32 %s15, 2
        // Predicated region
        $region53: #{tpu_custom_call.1} parent=51 // pred_check
          %p607 = pneg %p121
        $region54: #{tpu_custom_call.1} parent=51 // pred_check_branch
          %609 = sbr.rel (%p607) target = $region56
        $region55: #{tpu_custom_call.1} parent=51 // pred_region
          %s610 = sand.u32 %s106, 1
          %s611 = scalar_lea.sflag [#allocation5], %s610
          %s612 = sand.u32 %s106, 1
          %s613 = smul.addr %s612, 32
          %s614 = scalar_lea.vmem [#allocation8], %s613
          %616 = dma.done %s611, 512
        $region56: #{tpu_custom_call.1} parent=51 // pred_fallthru
          _
      $region52: #{tpu_custom_call.1} parent=5 // pred_fallthru
        _
    $region6: #{tpu_custom_call.1} parent=1 // loop_footer
      %s19 = sadd.s32 1, %s15
    $region7: #{tpu_custom_call.1} parent=1 // loop_footer_branch
      %14 = sbr.rel target = $region3
    $region8: #{tpu_custom_call.1} parent=1 // loop_exit
      _
    %617 = vsyncpa [#allocation4], 1
    %s618 = scalar_lea.sflag [#allocation4], 1
    %619 = vsyncpa %s618, 1
    %620 = vsyncpa [#allocation7], 1
    %s621 = scalar_lea.sflag [#allocation7], 1
    %622 = vsyncpa %s621, 1
    %623 = vsyncpa [#allocation5], 1
    %s624 = scalar_lea.sflag [#allocation5], 1
    %625 = vsyncpa %s624, 1

</llo_original>
